<compile_context>
chip_gen: v5e
topology: v5e:2x2
jax: 0.10.0
libtpu: 0.0.40
codegen_flags: <defaults>
</compile_context>

<pallas_src>
import jax
import jax.numpy as jnp
from jax.experimental import pallas as pl
from jax.experimental.pallas import tpu as pltpu


def _round_up(x, m):
    return ((x + m - 1) // m) * m


def _round_down(x, m):
    return (x // m) * m


def _pointwise_kernel(w_ref, x_ref, o_ref):
    # w_ref: (O, C)          resident weight (constant block index)
    # x_ref: (Nb, C, t_hw)   Nb batch elements x one spatial tile
    # o_ref: (Nb, O, t_hw)   lane-dense output tile
    w = w_ref[...]
    # Nb is a static (trace-time) int -> unrolled, plain MXU matmuls with
    # direct lane-dense stores (no batched-dot result transpose needed).
    for b in range(x_ref.shape[0]):
        o_ref[b] = jnp.dot(
            w, x_ref[b], preferred_element_type=jnp.float32
        ).astype(o_ref.dtype)


def _vmem_limit_bytes():
    """Generation-aware scoped-VMEM limit.

    v5e / v6e: 128 MiB physical VMEM -> allow ~96 MiB.
    v7x:       64 MiB per TensorCore -> allow ~48 MiB.
    Falls back to a conservative 48 MiB if the hardware query is unavailable.
    """
    phys = 64 << 20
    try:
        phys = int(pltpu.get_tpu_info().vmem_capacity_bytes)
    except Exception:
        pass
    return max(32 << 20, min((phys * 3) // 4, 100 << 20))


_TARGET_STEP_BYTES = 4 << 20    # aim for >= ~4 MiB of HBM traffic per grid step
_CAP_STEP_BYTES = 16 << 20      # keep a few grid steps alive for pipelining


def _divisors(n):
    return [d for d in range(1, n + 1) if n % d == 0]


def _choose_tiles(N, HW, C, O, dtype_bytes, tile_budget):
    """Pick (Nb, t_hw): batch-fold factor and lane-aligned spatial tile.

    Policy: per-step DMA volume >= ~4 MiB when possible (fold batch elements
    when HW alone is too short), never exceed the VMEM tile budget, keep t_hw
    a multiple of 128 so output stores stay unmasked and lane-dense.
    """
    hw_pad128 = _round_up(max(HW, 1), 128)
    col_bytes = (C + O) * dtype_bytes          # in + out, one copy, per hw column

    t_budget = _round_down(tile_budget // (2 * col_bytes), 128)   # double-buffered
    t_cap = _round_down(_CAP_STEP_BYTES // col_bytes, 128)
    t_hw = max(128, min(hw_pad128, max(t_budget, 128), max(t_cap, 128)))

    # Batch folding: only when one step already spans the whole spatial extent
    # but still falls short of the per-step traffic target.
    nb = 1
    if t_hw >= hw_pad128 and N > 1:
        step_bytes = t_hw * col_bytes
        if step_bytes < _TARGET_STEP_BYTES:
            for d in _divisors(N):
                if 2 * d * t_hw * col_bytes > tile_budget:
                    break
                nb = d
                if d * step_bytes >= _TARGET_STEP_BYTES:
                    break
    return nb, t_hw


def pointwise_conv2d(x, weight):
    """1x1 conv (no bias), matching PyTorch Conv2d semantics.

    Args:
      x:      (N, C, H, W)  NCHW input.
      weight: (O, C, 1, 1)  PyTorch Conv2d weight layout.
    Returns:
      (N, O, H, W) output, same dtype as x.
    """
    N, C, H, W = x.shape
    O = weight.shape[0]
    HW = H * W
    dtype_bytes = jnp.dtype(x.dtype).itemsize

    vmem_limit = _vmem_limit_bytes()
    # Budget for the pipelined activation/output tiles: subtract the
    # double-buffered resident weight block and leave compiler-scratch headroom.
    weight_bytes = 2 * O * C * dtype_bytes
    tile_budget = max(2 * 128 * (C + O) * dtype_bytes,
                      vmem_limit - weight_bytes - (4 << 20))
    # TODO(synk): for very large O*C (weight >~ half of VMEM) add C/O grid
    # tiling with a f32 VMEM accumulator instead of a single (O, C) block.

    nb, t_hw = _choose_tiles(N, HW, C, O, dtype_bytes, tile_budget)

    # Glue: NCHW -> (N, C, H*W).  No pad, no output slice (see header note).
    xm = x.reshape(N, C, HW)
    # NOTE: weights are cast to the activation dtype (documented precision
    # difference vs PyTorch when x is bf16/fp16 and weights are f32).
    wm = weight.reshape(O, C).astype(x.dtype)

    grid = (N // nb, pl.cdiv(HW, t_hw))

    cost = pl.CostEstimate(
        flops=2 * N * HW * C * O,
        bytes_accessed=dtype_bytes * (N * HW * C + O * C + N * HW * O),
        transcendentals=0,
    )

    out = pl.pallas_call(
        _pointwise_kernel,
        out_shape=jax.ShapeDtypeStruct((N, O, HW), x.dtype),
        grid_spec=pltpu.PrefetchScalarGridSpec(
            num_scalar_prefetch=0,
            grid=grid,
            in_specs=[
                pl.BlockSpec((O, C), lambda n, j: (0, 0)),             # weight
                pl.BlockSpec((nb, C, t_hw), lambda n, j: (n, 0, j)),   # activations
            ],
            out_specs=pl.BlockSpec((nb, O, t_hw), lambda n, j: (n, 0, j)),
        ),
        compiler_params=pltpu.CompilerParams(
            dimension_semantics=("parallel", "parallel"),
            vmem_limit_bytes=vmem_limit,
        ),
        cost_estimate=cost,
    )(wm, xm)

    return out.reshape(N, O, H, W)


if __name__ == "__main__":
    # Module config: in_channels=4, kernels_per_layer=1, out_channels=8, bias=False
    in_channels = 4
    kernels_per_layer = 1
    out_channels = 8
    N, H, W = 2, 16, 16
    C = in_channels * kernels_per_layer

    key = jax.random.PRNGKey(0)
    kx, kw = jax.random.split(key)

    x = jax.random.normal(kx, (N, C, H, W), dtype=jnp.float32)
    # Deterministic synthetic weight in PyTorch Conv2d layout (O, C, 1, 1).
    weight = jax.random.normal(kw, (out_channels, C, 1, 1), dtype=jnp.float32) * 0.1

    y = pointwise_conv2d(x, weight)
    y = jax.block_until_ready(y)

    # Reference (pure JAX) check of the 1x1-conv semantics.
    y_ref = jnp.einsum("nchw,oc->nohw", x, weight.reshape(out_channels, C))
    assert y.shape == (N, out_channels, H, W)
    assert jnp.allclose(y, y_ref, atol=1e-5, rtol=1e-5)

    print("KERNEL_OK")
</pallas_src>

<mosaic_0001>
module attributes {stable_mosaic.version = 11 : i64} {
  func.func @_pointwise_kernel(%arg0: i32, %arg1: i32, %arg2: memref<8x4xf32, #tpu.memory_space<vmem>>, %arg3: memref<2x4x256xf32, #tpu.memory_space<vmem>>, %arg4: memref<2x8x256xf32, #tpu.memory_space<vmem>>) attributes {dimension_semantics = [#tpu.dimension_semantics<parallel>, #tpu.dimension_semantics<parallel>], iteration_bounds = array<i64: 1, 1>, scalar_prefetch = 0 : i64, scratch_operands = 0 : i64, tpu.core_type = #tpu.core_type<tc>, window_params = [{pipeline_mode = #tpu.pipeline_mode<synchronous>, transform_indices = @transform_0, window_bounds = array<i64: 8, 4>}, {transform_indices = @transform_1, window_bounds = array<i64: 2, 4, 256>}, {transform_indices = @transform_2, window_bounds = array<i64: 2, 8, 256>}]} {
    %c0 = arith.constant 0 : index
    %c0_0 = arith.constant 0 : index
    %0 = vector.load %arg2[%c0, %c0_0] : memref<8x4xf32, #tpu.memory_space<vmem>>, vector<8x4xf32>
    %c0_1 = arith.constant 0 : index
    %c0_2 = arith.constant 0 : index
    %c0_3 = arith.constant 0 : index
    %1 = vector.load %arg3[%c0_1, %c0_2, %c0_3] : memref<2x4x256xf32, #tpu.memory_space<vmem>>, vector<1x4x256xf32>
    %2 = vector.shape_cast %1 : vector<1x4x256xf32> to vector<4x256xf32>
    %cst = arith.constant dense<0.000000e+00> : vector<8x256xf32>
    %3 = tpu.matmul %0, %2, %cst {dimension_numbers = #tpu.dot_dimension_numbers<[1], [0], [0], [1], [0, 0, 1, 1], [], []>} : vector<8x4xf32>, vector<4x256xf32>, vector<8x256xf32> -> vector<8x256xf32>
    %c0_4 = arith.constant 0 : index
    %c0_5 = arith.constant 0 : index
    %c0_6 = arith.constant 0 : index
    %4 = vector.load %arg4[%c0_4, %c0_5, %c0_6] : memref<2x8x256xf32, #tpu.memory_space<vmem>>, vector<1x8x256xf32>
    %5 = vector.shape_cast %4 : vector<1x8x256xf32> to vector<8x256xf32>
    %6 = vector.shape_cast %3 : vector<8x256xf32> to vector<1x8x256xf32>
    tpu.vector_store %arg4[%c0_4, %c0_5, %c0_6], %6 {strides = array<i32>} : memref<2x8x256xf32, #tpu.memory_space<vmem>>, vector<1x8x256xf32>,
    %c1 = arith.constant 1 : index
    %c0_7 = arith.constant 0 : index
    %c0_8 = arith.constant 0 : index
    %7 = vector.load %arg3[%c1, %c0_7, %c0_8] : memref<2x4x256xf32, #tpu.memory_space<vmem>>, vector<1x4x256xf32>
    %8 = vector.shape_cast %7 : vector<1x4x256xf32> to vector<4x256xf32>
    %cst_9 = arith.constant dense<0.000000e+00> : vector<8x256xf32>
    %9 = tpu.matmul %0, %8, %cst_9 {dimension_numbers = #tpu.dot_dimension_numbers<[1], [0], [0], [1], [0, 0, 1, 1], [], []>} : vector<8x4xf32>, vector<4x256xf32>, vector<8x256xf32> -> vector<8x256xf32>
    %c1_10 = arith.constant 1 : index
    %c0_11 = arith.constant 0 : index
    %c0_12 = arith.constant 0 : index
    %10 = vector.load %arg4[%c1_10, %c0_11, %c0_12] : memref<2x8x256xf32, #tpu.memory_space<vmem>>, vector<1x8x256xf32>
    %11 = vector.shape_cast %10 : vector<1x8x256xf32> to vector<8x256xf32>
    %12 = vector.shape_cast %9 : vector<8x256xf32> to vector<1x8x256xf32>
    tpu.vector_store %arg4[%c1_10, %c0_11, %c0_12], %12 {strides = array<i32>} : memref<2x8x256xf32, #tpu.memory_space<vmem>>, vector<1x8x256xf32>,
    return
  }
  func.func @transform_0(%arg0: i32, %arg1: i32) -> (i32, i32) {
    %c0_i32 = arith.constant 0 : i32
    %c0_i32_0 = arith.constant 0 : i32
    %c0_i32_1 = arith.constant 0 : i32
    return %c0_i32, %c0_i32_0 : i32, i32
  }
  func.func @transform_1(%arg0: i32, %arg1: i32) -> (i32, i32, i32) {
    %c0_i32 = arith.constant 0 : i32
    %c0_i32_0 = arith.constant 0 : i32
    return %arg0, %c0_i32, %arg1 : i32, i32, i32
  }
  func.func @transform_2(%arg0: i32, %arg1: i32) -> (i32, i32, i32) {
    %c0_i32 = arith.constant 0 : i32
    %c0_i32_0 = arith.constant 0 : i32
    return %arg0, %c0_i32, %arg1 : i32, i32, i32
  }
}

</mosaic_0001>

<llo_original>
// kernel: tpu_custom_call.1
$region0: #{tpu_custom_call.1}
  #allocation0 [shape = 'u32[]', space=smem, size = 0x4, offset = 0x4, fixed_abs, tag = 'smem constant byte address 0x4 - core index']
  #allocation1 [shape = 'u32[72,128]{1,0:T(1,128)}', space=vmem, size = 0x9000, scoped, tag = 'internal scratch']
  %s0 = inlined_call_operand.vmem [shape: f32[8,4], index: 0, kind: input, shape index: {}]
  %s1 = inlined_call_operand.hbm [shape: f32[2,4,256], index: 1, kind: input, shape index: {}]
  %s2 = inlined_call_operand.hbm [shape: f32[2,8,256], index: 2, kind: output, shape index: {}]
  %s3 = sld [smem:[#allocation0]]
  $region22: #{tpu_custom_call.1} parent=0
    _
  %s5 = ssub.s32 1, %s3
  %s6 = scalar_select 0, %s5, %s3
  $region1: #{tpu_custom_call.1} parent=0
    #allocation2 [shape = 'u8[8192]{0}', space=vmem, size = 0x2000, scoped, tag = 'input window, operand 1, single buffered']
    #allocation3 [shape = 's32[1]{0}', space=sflag, size = 0x4, scoped, tag = 'scoped memory for tpu_custom_call.1']
    #allocation4 [shape = 's32[1]{0}', space=sflag, size = 0x4, scoped, tag = 'scoped memory for tpu_custom_call.1']
    #allocation5 [shape = 'u8[16384]{0}', space=vmem, size = 0x4000, scoped, tag = 'output window, operand 0, single buffered']
    %7 = vsyncpa [#allocation3], 0
    %8 = vsyncpa [#allocation4], 0
    // Predicated region
    $region2: #{tpu_custom_call.1} parent=1 // pred_check
      _
    $region3: #{tpu_custom_call.1} parent=1 // pred_check_branch
      %10 = sbr.rel (0) target = $region5
    $region4: #{tpu_custom_call.1} parent=1 // pred_region
      _
    $region5: #{tpu_custom_call.1} parent=1 // pred_fallthru
      _
    // Predicated region
    $region6: #{tpu_custom_call.1} parent=1 // pred_check
      _
    $region7: #{tpu_custom_call.1} parent=1 // pred_check_branch
      %12 = sbr.rel (0) target = $region9
    $region8: #{tpu_custom_call.1} parent=1 // pred_region
      %14 = vsyncadd [#allocation3], 0
      %s15 = sshll.u32 %s1, 4
      %s16 = int_to_ptr.hbm [resolvable:$true] %s15
      %s17 = sshll.u32 [#allocation2], 4
      %s18 = int_to_ptr.vmem [resolvable:$true] %s17
      %23 = dma.hbm_to_vmem [thread:$0]  %s16, 256, %s18, [#allocation3], 128, 128, 8
    $region9: #{tpu_custom_call.1} parent=1 // pred_fallthru
      _
    // Predicated region
    $region10: #{tpu_custom_call.1} parent=1 // pred_check
      _
    $region11: #{tpu_custom_call.1} parent=1 // pred_check_branch
      %25 = sbr.rel (0) target = $region13
    $region12: #{tpu_custom_call.1} parent=1 // pred_region
      %27 = dma.done [#allocation3], 256
    $region13: #{tpu_custom_call.1} parent=1 // pred_fallthru
      _
    %v28 = vld [vmem:[%s0] sm:$0xff]
    %v29 = vld [vmem:[#allocation2] sm:$0xff]
    %31 = vst [vmem:[#allocation1] ss:$2 sm:$0xff] %v29
    %v32 = vld.sshfl [vmem:[#allocation1] sm:$0xff pattern:$0x75316420]
    %v33 = vld.sshfl [vmem:[#allocation1 + $0x8] sm:$0xff pattern:$0x75316420]
    %vm34 = vcmask 31744
    %v36 = vsel %vm34, %v28, 0
    %vm38 = vcmask 1043456
    %v39 = vsel %vm38, %v32, 0
    %v41 = vsel %vm38, %v33, 0
    %43 = vmatpush.msra.mxu0 0.0
    %44 = vmatpush.msra.mxu0 0.0
    %45 = vmatpush.msra.mxu0 0.0
    %46 = vmatpush.msra.mxu0 0.0
    %47 = vmatpush.msra.mxu0 0.0
    %48 = vmatpush.msra.mxu0 0.0
    %49 = vmatpush.msra.mxu0 0.0
    %50 = vmatpush.msra.mxu0 0.0
    %51 = vmatpush.msra.mxu0 0.0
    %52 = vmatpush.msra.mxu0 0.0
    %53 = vmatpush.msra.mxu0 0.0
    %54 = vmatpush.msra.mxu0 0.0
    %55 = vmatpush.msra.mxu0 0.0
    %56 = vmatpush.msra.mxu0 0.0
    %57 = vmatpush.msra.mxu0 0.0
    %58 = vmatpush.msra.mxu0 %v39
    %59 = vmatmul.f32.gmra.mxu0 %v36
    %v60 = vpop.f32.mrf.mxu0
    %v61 = vadd.f32 0.0, %v60
    %62 = vdwg.mxu0
    %63 = vmatpush.msra.mxu0 0.0
    %64 = vmatpush.msra.mxu0 0.0
    %65 = vmatpush.msra.mxu0 0.0
    %66 = vmatpush.msra.mxu0 0.0
    %67 = vmatpush.msra.mxu0 0.0
    %68 = vmatpush.msra.mxu0 0.0
    %69 = vmatpush.msra.mxu0 0.0
    %70 = vmatpush.msra.mxu0 0.0
    %71 = vmatpush.msra.mxu0 0.0
    %72 = vmatpush.msra.mxu0 0.0
    %73 = vmatpush.msra.mxu0 0.0
    %74 = vmatpush.msra.mxu0 0.0
    %75 = vmatpush.msra.mxu0 0.0
    %76 = vmatpush.msra.mxu0 0.0
    %77 = vmatpush.msra.mxu0 0.0
    %78 = vmatpush.msra.mxu0 %v41
    %79 = vmatmul.f32.gmra.mxu0 %v36
    %v80 = vpop.f32.mrf.mxu0
    %v81 = vadd.f32 0.0, %v80
    %82 = vdwg.mxu0
    %83 = vst [vmem:[#allocation5] sm:$0xff] %v61
    %84 = vst [vmem:[#allocation5 + $0x8] sm:$0xff] %v81
    %s85 = scalar_lea.vmem [#allocation2], 8
    %v86 = vld [vmem:[%s85] sm:$0xff]
    %88 = vst [vmem:[#allocation1] ss:$2 sm:$0xff] %v86
    %v89 = vld.sshfl [vmem:[#allocation1] sm:$0xff pattern:$0x75316420]
    %v90 = vld.sshfl [vmem:[#allocation1 + $0x8] sm:$0xff pattern:$0x75316420]
    %v91 = vsel %vm38, %v89, 0
    %v93 = vsel %vm38, %v90, 0
    %95 = vmatpush.msra.mxu0 0.0
    %96 = vmatpush.msra.mxu0 0.0
    %97 = vmatpush.msra.mxu0 0.0
    %98 = vmatpush.msra.mxu0 0.0
    %99 = vmatpush.msra.mxu0 0.0
    %100 = vmatpush.msra.mxu0 0.0
    %101 = vmatpush.msra.mxu0 0.0
    %102 = vmatpush.msra.mxu0 0.0
    %103 = vmatpush.msra.mxu0 0.0
    %104 = vmatpush.msra.mxu0 0.0
    %105 = vmatpush.msra.mxu0 0.0
    %106 = vmatpush.msra.mxu0 0.0
    %107 = vmatpush.msra.mxu0 0.0
    %108 = vmatpush.msra.mxu0 0.0
    %109 = vmatpush.msra.mxu0 0.0
    %110 = vmatpush.msra.mxu0 %v91
    %111 = vmatmul.f32.gmra.mxu0 %v36
    %v112 = vpop.f32.mrf.mxu0
    %v113 = vadd.f32 0.0, %v112
    %114 = vdwg.mxu0
    %115 = vmatpush.msra.mxu0 0.0
    %116 = vmatpush.msra.mxu0 0.0
    %117 = vmatpush.msra.mxu0 0.0
    %118 = vmatpush.msra.mxu0 0.0
    %119 = vmatpush.msra.mxu0 0.0
    %120 = vmatpush.msra.mxu0 0.0
    %121 = vmatpush.msra.mxu0 0.0
    %122 = vmatpush.msra.mxu0 0.0
    %123 = vmatpush.msra.mxu0 0.0
    %124 = vmatpush.msra.mxu0 0.0
    %125 = vmatpush.msra.mxu0 0.0
    %126 = vmatpush.msra.mxu0 0.0
    %127 = vmatpush.msra.mxu0 0.0
    %128 = vmatpush.msra.mxu0 0.0
    %129 = vmatpush.msra.mxu0 0.0
    %130 = vmatpush.msra.mxu0 %v93
    %131 = vmatmul.f32.gmra.mxu0 %v36
    %v132 = vpop.f32.mrf.mxu0
    %v133 = vadd.f32 0.0, %v132
    %134 = vdwg.mxu0
    %s135 = scalar_lea.vmem [#allocation5], 16
    %136 = vst [vmem:[%s135] sm:$0xff] %v113
    %137 = vst [vmem:[%s135 + $0x8] sm:$0xff] %v133
    // Predicated region
    $region14: #{tpu_custom_call.1} parent=1 // pred_check
      _
    $region15: #{tpu_custom_call.1} parent=1 // pred_check_branch
      %139 = sbr.rel (0) target = $region17
    $region16: #{tpu_custom_call.1} parent=1 // pred_region
      %141 = vsyncadd [#allocation4], 0
      %s142 = sshll.u32 [#allocation5], 4
      %s143 = int_to_ptr.vmem [resolvable:$true] %s142
      %s144 = sshll.u32 %s2, 4
      %s145 = int_to_ptr.hbm [resolvable:$true] %s144
      %150 = dma.vmem_to_hbm [thread:$0]  %s143, 512, %s145, [#allocation4], 256, 256, 16
    $region17: #{tpu_custom_call.1} parent=1 // pred_fallthru
      _
    // Predicated region
    $region18: #{tpu_custom_call.1} parent=1 // pred_check
      _
    $region19: #{tpu_custom_call.1} parent=1 // pred_check_branch
      %152 = sbr.rel (0) target = $region21
    $region20: #{tpu_custom_call.1} parent=1 // pred_region
      %154 = dma.done [#allocation4], 512
    $region21: #{tpu_custom_call.1} parent=1 // pred_fallthru
      _
    %155 = vsyncpa [#allocation3], 1
    %156 = vsyncpa [#allocation4], 1

</llo_original>
